<compile_context>
chip_gen: v7x
topology: tpu7x:2x2x1
jax: 0.10.0
libtpu: 0.0.40
codegen_flags: <defaults>
</compile_context>

<pallas_src>
import jax
import jax.numpy as jnp
from jax.experimental import pallas as pl
from jax.experimental.pallas import tpu as pltpu

_LANE = 128
_SUB = 8
_CHUNK_R = 128                       # rows per in-kernel streaming chunk
_TARGET_TILE_BYTES = 6 << 20         # ~6 MiB of each input per grid step
_FALLBACK_BYTES = 128 << 10          # below this, fused XLA beats a kernel launch


def _round_up(x: int, m: int) -> int:
    return -(-x // m) * m


def _xla_reg_loss(pred_pos, real_pos):
    diff = pred_pos.astype(jnp.float32) - real_pos.astype(jnp.float32)
    return jnp.sum(jnp.sqrt(jnp.sum(diff * diff, axis=1)))


def _make_kernel(d_pad: int, tile_r: int, total_rows: int, n_chunks: int):
    """Kernel over (tile_r, 128) flat blocks; writes one (8,128) partial/tile."""

    def kernel(pred_ref, real_ref, out_ref):
        pid = pl.program_id(0)
        tile_row0 = pid * tile_r

        # ---- hoisted per-tile constants (never recomputed in the chunk loop) --
        lane = jax.lax.broadcasted_iota(jnp.int32, (1, _LANE), 1)
        if d_pad > 1:
            # Probe the rotate-direction convention: under jnp.roll semantics
            # roll(x, 127)[i] == x[(i+1) % 128], and the tree below leaves each
            # sample's sum on the FIRST lane of its D-group; under the opposite
            # convention it lands on the LAST lane.  Pick the mask accordingly.
            probe = pltpu.roll(lane, shift=_LANE - 1, axis=1)
            is_fwd = probe == ((lane + 1) & (_LANE - 1))        # all-T or all-F
            lane_mod = lane & (d_pad - 1)
            group_mask = ((is_fwd & (lane_mod == 0))
                          | (~is_fwd & (lane_mod == (d_pad - 1))))  # (1, 128)
        else:
            group_mask = None                                    # every lane is a sample
        chunk_rows = jax.lax.broadcasted_iota(jnp.int32, (_CHUNK_R, 1), 0)

        def chunk_body(c, acc):
            row0 = pl.multiple_of(c * _CHUNK_R, _CHUNK_R)
            p = pred_ref[pl.ds(row0, _CHUNK_R), :].astype(jnp.float32)
            r = real_ref[pl.ds(row0, _CHUNK_R), :].astype(jnp.float32)
            diff = p - r
            ss = diff * diff                                     # (CHUNK_R, 128)

            # Per-sample sum over d_pad adjacent lanes: log2(d_pad) XLU rolls.
            k = 1
            while k < d_pad:
                ss = ss + pltpu.roll(ss, shift=_LANE - k, axis=1)
                k *= 2

            # Keep one lane per sample and drop garbage rows of the ragged
            # final block (rows >= total_rows).  Explicit zero padding
            # contributes sqrt(0) = 0 and needs no masking.
            valid = (chunk_rows + (tile_row0 + row0)) < total_rows   # (CHUNK_R, 1)
            mask = valid if group_mask is None else (group_mask & valid)
            norms = jnp.where(mask, jnp.sqrt(ss), 0.0)               # (CHUNK_R, 128)

            # Fold sublane groups into the running (8, 128) partial
            # (reshape + sum; layout-preserving, no long unrolled add chain).
            return acc + jnp.sum(
                norms.reshape(_CHUNK_R // _SUB, _SUB, _LANE), axis=0)

        acc0 = jnp.zeros((_SUB, _LANE), jnp.float32)
        out_ref[...] = jax.lax.fori_loop(0, n_chunks, chunk_body, acc0)

    return kernel


@jax.jit
def reg_loss(pred_pos: jax.Array, real_pos: jax.Array) -> jax.Array:
    """sum_i || pred_pos[i] - real_pos[i] ||_2  (matches RegLoss.forward)."""
    assert pred_pos.shape == real_pos.shape
    assert pred_pos.ndim == 2, "expected (N, D) positions"
    n, d = pred_pos.shape
    out_dtype = pred_pos.dtype
    itemsize = jnp.dtype(pred_pos.dtype).itemsize

    if n == 0 or d == 0:
        return jnp.zeros((), out_dtype)

    # Pad D up to the smallest power of two (a divisor of 128) when needed.
    d_pad = 1 << (d - 1).bit_length()

    # Tiny inputs / exotic dtypes / huge D: the fused XLA expression is already
    # at the HBM roofline and avoids the pallas_call launch cost.
    # TODO(synk): D > 128 would need a multi-row-per-sample reduction; fall back
    # to XLA for that (positions are 2/3/4-D in practice).
    if d_pad > _LANE or itemsize > 4 or n * d * itemsize < _FALLBACK_BYTES:
        return _xla_reg_loss(pred_pos, real_pos).astype(out_dtype)

    spl = _LANE // d_pad                      # samples per 128-lane row
    if d_pad != d or n % spl != 0:
        # One zero-pad pass (no transpose).  Padded samples/components are zero
        # in both inputs -> they contribute 0 to the loss.
        # TODO(synk): a (tile_r, 3*128) minor block would make D=3 zero-copy too.
        n_pad = _round_up(n, spl)
        pred = jnp.pad(pred_pos, ((0, n_pad - n), (0, d_pad - d)))
        real = jnp.pad(real_pos, ((0, n_pad - n), (0, d_pad - d)))
    else:
        n_pad, pred, real = n, pred_pos, real_pos

    total_rows = (n_pad * d_pad) // _LANE
    pred2 = pred.reshape(total_rows, _LANE)   # free bitcast-reshape
    real2 = real.reshape(total_rows, _LANE)

    # Tile sizing: ~6 MiB of each input per grid step, capped at ceil(rows/2)
    # (>= 2 grid steps so both v7x TensorCores get work), multiple of _CHUNK_R.
    target_rows = max(
        _CHUNK_R,
        (_TARGET_TILE_BYTES // (_LANE * itemsize)) // _CHUNK_R * _CHUNK_R)
    half_rows = _round_up(-(-total_rows // 2), _CHUNK_R)
    tile_r = max(_CHUNK_R, min(target_rows, half_rows))
    num_tiles = -(-total_rows // tile_r)
    n_chunks = tile_r // _CHUNK_R

    kernel = _make_kernel(d_pad, tile_r, total_rows, n_chunks)
    in_spec = pl.BlockSpec((tile_r, _LANE), lambda i: (i, 0))

    partials = pl.pallas_call(
        kernel,
        out_shape=jax.ShapeDtypeStruct((num_tiles * _SUB, _LANE), jnp.float32),
        grid=(num_tiles,),
        in_specs=[in_spec, in_spec],
        out_specs=pl.BlockSpec((_SUB, _LANE), lambda i: (i, 0)),
        compiler_params=pltpu.CompilerParams(
            dimension_semantics=("parallel",),   # independent tiles: v7x dual-TC
            vmem_limit_bytes=32 * 1024 * 1024,
        ),
        cost_estimate=pl.CostEstimate(
            flops=int(total_rows * _LANE * (4 + max(1, d_pad.bit_length()))),
            transcendentals=int(total_rows * _LANE),
            bytes_accessed=int(2 * total_rows * _LANE * itemsize
                               + num_tiles * _SUB * _LANE * 4),
        ),
    )(pred2, real2)

    # Tiny final reduction over per-tile partials (num_tiles * 1024 floats).
    return jnp.sum(partials).astype(out_dtype)


def _reference(pred_pos, real_pos):
    diff = pred_pos.astype(jnp.float32) - real_pos.astype(jnp.float32)
    return jnp.sum(jnp.sqrt(jnp.sum(diff * diff, axis=1)))


if __name__ == "__main__":
    key = jax.random.PRNGKey(0)
    ks = jax.random.split(key, 8)

    # (N, D) cases chosen to exercise every code path while staying small/fast:
    #   * (65536, 4): zero-copy flat path (D | 128, N*D % 128 == 0), 2 tiles.
    #   * (100000, 3): D padded 3 -> 4 and a ragged final block (row mask).
    #   * (193, 3) and (64, 4): tiny-input XLA fallback.
    cases = [(65536, 4), (100000, 3), (193, 3), (64, 4)]
    for idx, (n, d) in enumerate(cases):
        k1, k2 = ks[2 * idx], ks[2 * idx + 1]
        pred = jax.random.normal(k1, (n, d), dtype=jnp.float32)
        real = jax.random.normal(k2, (n, d), dtype=jnp.float32)
        got = reg_loss(pred, real)
        jax.block_until_ready(got)
        want = _reference(pred, real)
        assert jnp.allclose(got, want, rtol=1e-4, atol=1e-3), (n, d, got, want)

    print("KERNEL_OK")
</pallas_src>

<mosaic_0001>
module attributes {stable_mosaic.version = 11 : i64} {
  func.func @kernel(%arg0: i32, %arg1: memref<1024x128xf32, #tpu.memory_space<vmem>>, %arg2: memref<1024x128xf32, #tpu.memory_space<vmem>>, %arg3: memref<8x128xf32, #tpu.memory_space<vmem>>) attributes {dimension_semantics = [#tpu.dimension_semantics<parallel>], iteration_bounds = array<i64: 2>, scalar_prefetch = 0 : i64, scratch_operands = 0 : i64, tpu.core_type = #tpu.core_type<tc>, window_params = [{transform_indices = @transform_0, window_bounds = array<i64: 1024, 128>}, {transform_indices = @transform_1, window_bounds = array<i64: 1024, 128>}, {transform_indices = @transform_2, window_bounds = array<i64: 8, 128>}]} {
    %c1024_i32 = arith.constant 1024 : i32
    %0 = arith.muli %arg0, %c1024_i32 : i32
    %1 = tpu.iota {dimensions = array<i32: 1>} : vector<1x128xi32>
    %c127_i32 = arith.constant 127 : i32
    %2 = tpu.dynamic_rotate %1 by %c127_i32 dim 1 : vector<1x128xi32>, i32 -> vector<1x128xi32>
    %c1_i32 = arith.constant 1 : i32
    %3 = vector.broadcast %c1_i32 : i32 to vector<1x128xi32>
    %4 = arith.addi %1, %3 : vector<1x128xi32>
    %c127_i32_0 = arith.constant 127 : i32
    %5 = vector.broadcast %c127_i32_0 : i32 to vector<1x128xi32>
    %6 = arith.andi %4, %5 : vector<1x128xi32>
    %7 = arith.cmpi eq, %2, %6 : vector<1x128xi32>
    %c3_i32 = arith.constant 3 : i32
    %8 = vector.broadcast %c3_i32 : i32 to vector<1x128xi32>
    %9 = arith.andi %1, %8 : vector<1x128xi32>
    %c0_i32 = arith.constant 0 : i32
    %10 = vector.broadcast %c0_i32 : i32 to vector<1x128xi32>
    %11 = arith.cmpi eq, %9, %10 : vector<1x128xi32>
    %12 = arith.andi %7, %11 : vector<1x128xi1>
    %cst = arith.constant dense<true> : vector<1x128xi1>
    %13 = arith.xori %7, %cst : vector<1x128xi1>
    %c3_i32_1 = arith.constant 3 : i32
    %14 = vector.broadcast %c3_i32_1 : i32 to vector<1x128xi32>
    %15 = arith.cmpi eq, %9, %14 : vector<1x128xi32>
    %16 = arith.andi %13, %15 : vector<1x128xi1>
    %17 = arith.ori %12, %16 : vector<1x128xi1>
    %18 = tpu.iota {dimensions = array<i32: 0>} : vector<128x1xi32>
    %cst_2 = arith.constant 0.000000e+00 : f32
    %19 = vector.broadcast %cst_2 : f32 to vector<8x128xf32>
    %c0_i32_3 = arith.constant 0 : i32
    %c8_i32 = arith.constant 8 : i32
    %20 = arith.addi %c0_i32_3, %c8_i32 : i32
    %c1_i32_4 = arith.constant 1 : i32
    %21 = scf.for %arg4 = %c0_i32_3 to %20 step %c1_i32_4 iter_args(%arg5 = %19) -> (vector<8x128xf32>)  : i32 {
      %c128_i32 = arith.constant 128 : i32
      %23 = arith.muli %arg4, %c128_i32 : i32
      %24 = tpu.assume_multiple %23, 128 : i32
      %25 = arith.index_cast %24 : i32 to index
      %c0_7 = arith.constant 0 : index
      %26 = vector.load %arg1[%25, %c0_7] : memref<1024x128xf32, #tpu.memory_space<vmem>>, vector<128x128xf32>
      %27 = arith.index_cast %24 : i32 to index
      %c0_8 = arith.constant 0 : index
      %28 = vector.load %arg2[%27, %c0_8] : memref<1024x128xf32, #tpu.memory_space<vmem>>, vector<128x128xf32>
      %29 = arith.subf %26, %28 : vector<128x128xf32>
      %30 = arith.mulf %29, %29 : vector<128x128xf32>
      %c127_i32_9 = arith.constant 127 : i32
      %31 = tpu.dynamic_rotate %30 by %c127_i32_9 dim 1 : vector<128x128xf32>, i32 -> vector<128x128xf32>
      %32 = arith.addf %30, %31 : vector<128x128xf32>
      %c126_i32 = arith.constant 126 : i32
      %33 = tpu.dynamic_rotate %32 by %c126_i32 dim 1 : vector<128x128xf32>, i32 -> vector<128x128xf32>
      %34 = arith.addf %32, %33 : vector<128x128xf32>
      %35 = arith.addi %0, %24 : i32
      %36 = vector.broadcast %35 : i32 to vector<128x1xi32>
      %37 = arith.addi %18, %36 : vector<128x1xi32>
      %c2048_i32 = arith.constant 2048 : i32
      %38 = vector.broadcast %c2048_i32 : i32 to vector<128x1xi32>
      %39 = arith.cmpi slt, %37, %38 : vector<128x1xi32>
      %40 = vector.broadcast %17 : vector<1x128xi1> to vector<128x128xi1>
      %41 = vector.broadcast %39 : vector<128x1xi1> to vector<128x128xi1>
      %42 = arith.andi %40, %41 : vector<128x128xi1>
      %43 = math.sqrt %34 : vector<128x128xf32>
      %cst_10 = arith.constant 0.000000e+00 : f32
      %44 = vector.broadcast %cst_10 : f32 to vector<128x128xf32>
      %45 = arith.select %42, %43, %44 : vector<128x128xi1>, vector<128x128xf32>
      %46 = vector.shape_cast %45 : vector<128x128xf32> to vector<16x8x128xf32>
      %cst_11 = arith.constant dense<0.000000e+00> : vector<8x128xf32>
      %47 = vector.multi_reduction <add>, %46, %cst_11 [0] : vector<16x8x128xf32> to vector<8x128xf32>
      %48 = arith.addf %arg5, %47 : vector<8x128xf32>
      scf.yield %48 : vector<8x128xf32>
    }
    %c8_i32_5 = arith.constant 8 : i32
    %c0 = arith.constant 0 : index
    %c0_6 = arith.constant 0 : index
    %22 = vector.load %arg3[%c0, %c0_6] : memref<8x128xf32, #tpu.memory_space<vmem>>, vector<8x128xf32>
    tpu.vector_store %arg3[%c0, %c0_6], %21 {strides = array<i32>} : memref<8x128xf32, #tpu.memory_space<vmem>>, vector<8x128xf32>,
    return
  }
  func.func @transform_0(%arg0: i32) -> (i32, i32) {
    %c0_i32 = arith.constant 0 : i32
    %c0_i32_0 = arith.constant 0 : i32
    return %arg0, %c0_i32 : i32, i32
  }
  func.func @transform_1(%arg0: i32) -> (i32, i32) {
    %c0_i32 = arith.constant 0 : i32
    %c0_i32_0 = arith.constant 0 : i32
    return %arg0, %c0_i32 : i32, i32
  }
  func.func @transform_2(%arg0: i32) -> (i32, i32) {
    %c0_i32 = arith.constant 0 : i32
    %c0_i32_0 = arith.constant 0 : i32
    return %arg0, %c0_i32 : i32, i32
  }
}

</mosaic_0001>

<llo_original>
// kernel: reg_loss.1
$region0: #{reg_loss.1}
  #allocation0 [shape = 'u32[]', space=smem, size = 0x4, offset = 0x4, fixed_abs, tag = 'smem constant byte address 0x4 - core index']
  #allocation1 [shape = 'u32[144,128]{1,0:T(1,128)}', space=vmem, size = 0x12000, scoped, tag = 'internal scratch']
  %s0 = inlined_call_operand.hbm [shape: f32[2048,128], index: 0, kind: input, shape index: {}]
  %s1 = inlined_call_operand.hbm [shape: f32[2048,128], index: 1, kind: input, shape index: {}]
  %s2 = inlined_call_operand.vmem [shape: f32[16,128], index: 2, kind: output, shape index: {}]
  %s3 = sld [smem:[#allocation0]]
  $region56: #{reg_loss.1} parent=0
    _
  %s5 = ssub.s32 1, %s3
  %s6 = scalar_select 0, %s5, %s3
  $region1: #{reg_loss.1} parent=0
    #allocation2 [shape = 'u8[1048576]{0}', space=vmem, size = 0x100000, scoped, tag = 'input window, operand 0']
    #allocation3 [shape = 's32[2]{0}', space=sflag, size = 0x8, scoped, tag = 'scoped memory for reg_loss.1']
    #allocation4 [shape = 'u8[1048576]{0}', space=vmem, size = 0x100000, scoped, tag = 'input window, operand 1']
    #allocation5 [shape = 's32[2]{0}', space=sflag, size = 0x8, scoped, tag = 'scoped memory for reg_loss.1']
    %7 = vsyncpa [#allocation3], 0
    %s8 = scalar_lea.sflag [#allocation3], 1
    %9 = vsyncpa %s8, 0
    %10 = vsyncpa [#allocation5], 0
    %s11 = scalar_lea.sflag [#allocation5], 1
    %12 = vsyncpa %s11, 0
    loop: start=0, step=1, limit=4
    $region2: #{reg_loss.1} parent=1 // loop_pre_header
      _
    $region3: #{reg_loss.1} parent=1 // loop_header
      %s14 = sphi 0, %s18
      %p15 = scmp.ge.s32.totalorder %s14, 4
      %s24 = sphi 0, %s26
      %s27 = sphi 0, %s24
      %s28 = sphi 0, %s27
      %s44 = sphi 0, %s28
      %s50 = sphi 0, %s52
      %s53 = sphi 0, %s50
      %s54 = sphi 0, %s53
      %s70 = sphi 0, %s54
      %s76 = sphi 0, %s78
      %s79 = sphi 0, %s76
      %s80 = sphi 0, %s79
      %s96 = sphi 0, %s80
    $region4: #{reg_loss.1} parent=1 // loop_header_branch
      %17 = sbr.rel (%p15) target = $region8
    $region5: #{reg_loss.1} parent=1 // loop_body
      %s19 = ssub.s32 %s14, 1
      %s20 = ssub.s32 %s14, 2
      %s21 = sadd.s32 %s14, 1
      %s22 = ssub.s32 %s14, %s21
      %p23 = scmp.eq.s32.totalorder %s22, 0
      %s25 = sadd.s32 %s24, 1
      %s26 = scalar_select %p23, %s24, %s25
      %p29 = pneg %p23
      %p30 = scmp.eq.s32.totalorder %s14, 1
      %p31 = por %p29, %p30
      %p32 = scmp.ne.s32.totalorder %s24, %s27
      %p33 = scmp.eq.s32.totalorder %s14, 0
      %p34 = por %p32, %p33
      %p35 = scmp.ne.s32.totalorder %s24, %s27
      %p36 = scmp.eq.s32.totalorder %s19, 1
      %p37 = por %p35, %p36
      %p38 = scmp.ne.s32.totalorder %s27, %s28
      %p39 = scmp.eq.s32.totalorder %s19, 0
      %p40 = por %p38, %p39
      %p41 = scmp.ne.s32.totalorder %s27, %s28
      %p42 = scmp.eq.s32.totalorder %s20, 1
      %p43 = por %p41, %p42
      %p45 = scmp.ne.s32.totalorder %s28, %s44
      %p46 = scmp.eq.s32.totalorder %s20, 0
      %p47 = por %p45, %p46
      %s48 = ssub.s32 %s14, %s21
      %p49 = scmp.eq.s32.totalorder %s48, 0
      %s51 = sadd.s32 %s50, 1
      %s52 = scalar_select %p49, %s50, %s51
      %p55 = pneg %p49
      %p56 = scmp.eq.s32.totalorder %s14, 1
      %p57 = por %p55, %p56
      %p58 = scmp.ne.s32.totalorder %s50, %s53
      %p59 = scmp.eq.s32.totalorder %s14, 0
      %p60 = por %p58, %p59
      %p61 = scmp.ne.s32.totalorder %s50, %s53
      %p62 = scmp.eq.s32.totalorder %s19, 1
      %p63 = por %p61, %p62
      %p64 = scmp.ne.s32.totalorder %s53, %s54
      %p65 = scmp.eq.s32.totalorder %s19, 0
      %p66 = por %p64, %p65
      %p67 = scmp.ne.s32.totalorder %s53, %s54
      %p68 = scmp.eq.s32.totalorder %s20, 1
      %p69 = por %p67, %p68
      %p71 = scmp.ne.s32.totalorder %s54, %s70
      %p72 = scmp.eq.s32.totalorder %s20, 0
      %p73 = por %p71, %p72
      %s74 = ssub.s32 %s14, %s21
      %p75 = scmp.eq.s32.totalorder %s74, 0
      %s77 = sadd.s32 %s76, 1
      %s78 = scalar_select %p75, %s76, %s77
      %p81 = pneg %p75
      %p82 = scmp.eq.s32.totalorder %s14, 1
      %p83 = por %p81, %p82
      %p84 = scmp.ne.s32.totalorder %s76, %s79
      %p85 = scmp.eq.s32.totalorder %s14, 0
      %p86 = por %p84, %p85
      %p87 = scmp.ne.s32.totalorder %s76, %s79
      %p88 = scmp.eq.s32.totalorder %s19, 1
      %p89 = por %p87, %p88
      %p90 = scmp.ne.s32.totalorder %s79, %s80
      %p91 = scmp.eq.s32.totalorder %s19, 0
      %p92 = por %p90, %p91
      %p93 = scmp.ne.s32.totalorder %s79, %s80
      %p94 = scmp.eq.s32.totalorder %s20, 1
      %p95 = por %p93, %p94
      %p97 = scmp.ne.s32.totalorder %s80, %s96
      %p98 = scmp.eq.s32.totalorder %s20, 0
      %p99 = por %p97, %p98
      %p100 = scmp.le.s32.totalorder 1, %s14
      %p101 = scmp.lt.s32.totalorder %s14, 3
      %p102 = pnand %p100, %p101
      %p103 = pneg %p102
      // Predicated region
      $region9: #{reg_loss.1} parent=5 // pred_check
        _
      $region10: #{reg_loss.1} parent=5 // pred_check_branch
        %105 = sbr.rel (%p102) target = $region12
      $region11: #{reg_loss.1} parent=5 // pred_region
        %s106 = ssub.s32 %s14, 1
      $region12: #{reg_loss.1} parent=5 // pred_fallthru
        _
      %p107 = scmp.lt.s32.totalorder %s14, 2
      // Predicated region
      $region13: #{reg_loss.1} parent=5 // pred_check
        %p108 = pneg %p107
      $region14: #{reg_loss.1} parent=5 // pred_check_branch
        %110 = sbr.rel (%p108) target = $region16
      $region15: #{reg_loss.1} parent=5 // pred_region
        // Predicated region
        $region17: #{reg_loss.1} parent=15 // pred_check
          %p111 = pneg %p34
        $region18: #{reg_loss.1} parent=15 // pred_check_branch
          %113 = sbr.rel (%p111) target = $region20
        $region19: #{reg_loss.1} parent=15 // pred_region
          %s114 = sand.u32 %s24, 1
          %s115 = scalar_lea.sflag [#allocation3], %s114
          %s116 = sand.u32 %s24, 1
          %s117 = smul.addr %s116, 1024
          %s118 = scalar_lea.vmem [#allocation2], %s117
          %s119 = smul.u32 128, %s14
          %s121 = ssub.s32 16384, 16384
          %122 = vsyncadd %s115, %s121
          %s123 = smul.addr %s119, 128
          %s124 = scalar_lea.hbm %s0, %s123
          %s125 = sshll.u32 %s118, 4
          %s126 = int_to_ptr.vmem [resolvable:$true] %s125
          %131 = dma.hbm_to_vmem [thread:$0]  %s124, 16384, %s126, %s115, 128, 128, 8
        $region20: #{reg_loss.1} parent=15 // pred_fallthru
          _
        // Predicated region
        $region21: #{reg_loss.1} parent=15 // pred_check
          %p132 = pneg %p60
        $region22: #{reg_loss.1} parent=15 // pred_check_branch
          %134 = sbr.rel (%p132) target = $region24
        $region23: #{reg_loss.1} parent=15 // pred_region
          %s135 = sand.u32 %s50, 1
          %s136 = scalar_lea.sflag [#allocation5], %s135
          %s137 = sand.u32 %s50, 1
          %s138 = smul.addr %s137, 1024
          %s139 = scalar_lea.vmem [#allocation4], %s138
          %s140 = smul.u32 128, %s14
          %s142 = ssub.s32 16384, 16384
          %143 = vsyncadd %s136, %s142
          %s144 = smul.addr %s140, 128
          %s145 = scalar_lea.hbm %s1, %s144
          %s146 = sshll.u32 %s139, 4
          %s147 = int_to_ptr.vmem [resolvable:$true] %s146
          %152 = dma.hbm_to_vmem [thread:$0]  %s145, 16384, %s147, %s136, 128, 128, 8
        $region24: #{reg_loss.1} parent=15 // pred_fallthru
          _
      $region16: #{reg_loss.1} parent=5 // pred_fallthru
        _
      %p153 = scmp.le.s32.totalorder 1, %s14
      %p154 = scmp.lt.s32.totalorder %s14, 3
      %p155 = pnand %p153, %p154
      %p156 = pneg %p155
      // Predicated region
      $region25: #{reg_loss.1} parent=5 // pred_check
        _
      $region26: #{reg_loss.1} parent=5 // pred_check_branch
        %158 = sbr.rel (%p155) target = $region28
      $region27: #{reg_loss.1} parent=5 // pred_region
        %s159 = ssub.s32 %s14, 1
        %s160 = sand.u32 %s27, 1
        %s161 = scalar_lea.sflag [#allocation3], %s160
        %s162 = sand.u32 %s27, 1
        %s163 = smul.addr %s162, 1024
        %s164 = scalar_lea.vmem [#allocation2], %s163
        // Predicated region
        $region29: #{reg_loss.1} parent=27 // pred_check
          %p165 = pneg %p40
        $region30: #{reg_loss.1} parent=27 // pred_check_branch
          %167 = sbr.rel (%p165) target = $region32
        $region31: #{reg_loss.1} parent=27 // pred_region
          %168 = dma.done %s161, 16384
        $region32: #{reg_loss.1} parent=27 // pred_fallthru
          _
        %s169 = sand.u32 %s53, 1
        %s170 = scalar_lea.sflag [#allocation5], %s169
        %s171 = sand.u32 %s53, 1
        %s172 = smul.addr %s171, 1024
        %s173 = scalar_lea.vmem [#allocation4], %s172
        // Predicated region
        $region33: #{reg_loss.1} parent=27 // pred_check
          %p174 = pneg %p66
        $region34: #{reg_loss.1} parent=27 // pred_check_branch
          %176 = sbr.rel (%p174) target = $region36
        $region35: #{reg_loss.1} parent=27 // pred_region
          %177 = dma.done %s170, 16384
        $region36: #{reg_loss.1} parent=27 // pred_fallthru
          _
        %s178 = sand.u32 %s27, 1
        %s179 = scalar_lea.sflag [#allocation3], %s178
        %s180 = sand.u32 %s27, 1
        %s181 = smul.addr %s180, 1024
        %s182 = scalar_lea.vmem [#allocation2], %s181
        %p183 = pneg %p40
        %p184 = pneg %p37
        %s185 = sand.u32 %s53, 1
        %s186 = scalar_lea.sflag [#allocation5], %s185
        %s187 = sand.u32 %s53, 1
        %s188 = smul.addr %s187, 1024
        %s189 = scalar_lea.vmem [#allocation4], %s188
        %p190 = pneg %p66
        %p191 = pneg %p63
        %p192 = pneg %p92
        %p193 = pneg %p89
        %p194 = scmp.lt.s32.totalorder %s19, 1
        %s195 = scalar_select %p194, %s19, 1
        %s196 = smul.addr %s195, 8
        %s197 = scalar_lea.vmem %s2, %s196
        %s198 = smul.u32 128, %s19
        %s199 = smul.u32 128, %s19
        %p200 = scmp.lt.s32.totalorder %s19, 1
        %s201 = scalar_select %p200, %s19, 1
        %s202 = smul.addr %s201, 8
        %s203 = scalar_lea.vmem %s2, %s202
        %s204 = smul.u32 %s19, 1024
        %v205 = vlaneseq
        %v206 = vand.u32 %v205, 127
        %207 = vrot.lane.b32.xlu0 %v206, 127
        %v208 = vpop.permute.xlu0 %207
        %v209 = vadd.s32 %v206, 1
        %v210 = vand.u32 %v209, 127
        %vm211 = vcmp.eq.s32.totalorder %v208, %v210
        %v212 = vand.u32 %v206, 3
        %vm213 = vcmp.eq.s32.totalorder %v212, 0
        %vm214 = vmand %vm211, %vm213
        %vm215 = vmxor %vm211, 1
        %vm216 = vcmp.eq.s32.totalorder %v212, 3
        %vm217 = vmand %vm215, %vm216
        %vm218 = vmor %vm214, %vm217
        %v219 = vlaneseq
        %v220 = vshrl.u32 %v219, 7
        %v221 = vadd.s32 %v220, 8
        %v222 = vadd.s32 %v220, 16
        %v223 = vadd.s32 %v220, 24
        %v224 = vadd.s32 %v220, 32
        %v225 = vadd.s32 %v220, 40
        %v226 = vadd.s32 %v220, 48
        %v227 = vadd.s32 %v220, 56
        %v228 = vadd.s32 %v220, 64
        %v229 = vadd.s32 %v220, 72
        %v230 = vadd.s32 %v220, 80
        %v231 = vadd.s32 %v220, 88
        %v232 = vadd.s32 %v220, 96
        %v233 = vadd.s32 %v220, 104
        %v234 = vadd.s32 %v220, 112
        %v235 = vadd.s32 %v220, 120
        loop: start=0, step=1, limit=8
        $region37: #{reg_loss.1} parent=27 // loop_pre_header
          _
        $region38: #{reg_loss.1} parent=27 // loop_header
          %s237 = sphi 0, %s241
          %p238 = scmp.ge.s32.totalorder %s237, 8
          %v242 = vphi 0.0, %v637
        $region39: #{reg_loss.1} parent=27 // loop_header_branch
          %240 = sbr.rel (%p238) target = $region43
        $region40: #{reg_loss.1} parent=27 // loop_body
          %s243 = smul.u32 %s237, 128
          %s244 = scalar_lea.vmem %s164, %s243 [#allocation2]
          %v245 = vld [vmem:[%s244] sm:$0xff]
          %v246 = vld [vmem:[%s244 + $0x8] sm:$0xff]
          %v247 = vld [vmem:[%s244 + $0x10] sm:$0xff]
          %v248 = vld [vmem:[%s244 + $0x18] sm:$0xff]
          %v249 = vld [vmem:[%s244 + $0x20] sm:$0xff]
          %v250 = vld [vmem:[%s244 + $0x28] sm:$0xff]
          %v251 = vld [vmem:[%s244 + $0x30] sm:$0xff]
          %v252 = vld [vmem:[%s244 + $0x38] sm:$0xff]
          %v253 = vld [vmem:[%s244 + $0x40] sm:$0xff]
          %v254 = vld [vmem:[%s244 + $0x48] sm:$0xff]
          %v255 = vld [vmem:[%s244 + $0x50] sm:$0xff]
          %v256 = vld [vmem:[%s244 + $0x58] sm:$0xff]
          %v257 = vld [vmem:[%s244 + $0x60] sm:$0xff]
          %v258 = vld [vmem:[%s244 + $0x68] sm:$0xff]
          %v259 = vld [vmem:[%s244 + $0x70] sm:$0xff]
          %v260 = vld [vmem:[%s244 + $0x78] sm:$0xff]
          %s261 = scalar_lea.vmem %s173, %s243 [#allocation4]
          %v262 = vld [vmem:[%s261] sm:$0xff]
          %v263 = vld [vmem:[%s261 + $0x8] sm:$0xff]
          %v264 = vld [vmem:[%s261 + $0x10] sm:$0xff]
          %v265 = vld [vmem:[%s261 + $0x18] sm:$0xff]
          %v266 = vld [vmem:[%s261 + $0x20] sm:$0xff]
          %v267 = vld [vmem:[%s261 + $0x28] sm:$0xff]
          %v268 = vld [vmem:[%s261 + $0x30] sm:$0xff]
          %v269 = vld [vmem:[%s261 + $0x38] sm:$0xff]
          %v270 = vld [vmem:[%s261 + $0x40] sm:$0xff]
          %v271 = vld [vmem:[%s261 + $0x48] sm:$0xff]
          %v272 = vld [vmem:[%s261 + $0x50] sm:$0xff]
          %v273 = vld [vmem:[%s261 + $0x58] sm:$0xff]
          %v274 = vld [vmem:[%s261 + $0x60] sm:$0xff]
          %v275 = vld [vmem:[%s261 + $0x68] sm:$0xff]
          %v276 = vld [vmem:[%s261 + $0x70] sm:$0xff]
          %v277 = vld [vmem:[%s261 + $0x78] sm:$0xff]
          %v278 = vsub.f32 %v245, %v262
          %v279 = vsub.f32 %v246, %v263
          %v280 = vsub.f32 %v247, %v264
          %v281 = vsub.f32 %v248, %v265
          %v282 = vsub.f32 %v249, %v266
          %v283 = vsub.f32 %v250, %v267
          %v284 = vsub.f32 %v251, %v268
          %v285 = vsub.f32 %v252, %v269
          %v286 = vsub.f32 %v253, %v270
          %v287 = vsub.f32 %v254, %v271
          %v288 = vsub.f32 %v255, %v272
          %v289 = vsub.f32 %v256, %v273
          %v290 = vsub.f32 %v257, %v274
          %v291 = vsub.f32 %v258, %v275
          %v292 = vsub.f32 %v259, %v276
          %v293 = vsub.f32 %v260, %v277
          %v294 = vmul.f32 %v278, %v278
          %v295 = vmul.f32 %v279, %v279
          %v296 = vmul.f32 %v280, %v280
          %v297 = vmul.f32 %v281, %v281
          %v298 = vmul.f32 %v282, %v282
          %v299 = vmul.f32 %v283, %v283
          %v300 = vmul.f32 %v284, %v284
          %v301 = vmul.f32 %v285, %v285
          %v302 = vmul.f32 %v286, %v286
          %v303 = vmul.f32 %v287, %v287
          %v304 = vmul.f32 %v288, %v288
          %v305 = vmul.f32 %v289, %v289
          %v306 = vmul.f32 %v290, %v290
          %v307 = vmul.f32 %v291, %v291
          %v308 = vmul.f32 %v292, %v292
          %v309 = vmul.f32 %v293, %v293
          %310 = vrot.lane.b32.xlu0 %v294, 127
          %v311 = vpop.permute.xlu0 %310
          %312 = vrot.lane.b32.xlu0 %v295, 127
          %v313 = vpop.permute.xlu0 %312
          %314 = vrot.lane.b32.xlu0 %v296, 127
          %v315 = vpop.permute.xlu0 %314
          %316 = vrot.lane.b32.xlu0 %v297, 127
          %v317 = vpop.permute.xlu0 %316
          %318 = vrot.lane.b32.xlu0 %v298, 127
          %v319 = vpop.permute.xlu0 %318
          %320 = vrot.lane.b32.xlu0 %v299, 127
          %v321 = vpop.permute.xlu0 %320
          %322 = vrot.lane.b32.xlu0 %v300, 127
          %v323 = vpop.permute.xlu0 %322
          %324 = vrot.lane.b32.xlu0 %v301, 127
          %v325 = vpop.permute.xlu0 %324
          %326 = vrot.lane.b32.xlu0 %v302, 127
          %v327 = vpop.permute.xlu0 %326
          %328 = vrot.lane.b32.xlu0 %v303, 127
          %v329 = vpop.permute.xlu0 %328
          %330 = vrot.lane.b32.xlu0 %v304, 127
          %v331 = vpop.permute.xlu0 %330
          %332 = vrot.lane.b32.xlu0 %v305, 127
          %v333 = vpop.permute.xlu0 %332
          %334 = vrot.lane.b32.xlu0 %v306, 127
          %v335 = vpop.permute.xlu0 %334
          %336 = vrot.lane.b32.xlu0 %v307, 127
          %v337 = vpop.permute.xlu0 %336
          %338 = vrot.lane.b32.xlu0 %v308, 127
          %v339 = vpop.permute.xlu0 %338
          %340 = vrot.lane.b32.xlu0 %v309, 127
          %v341 = vpop.permute.xlu0 %340
          %v342 = vadd.f32 %v294, %v311
          %v343 = vadd.f32 %v295, %v313
          %v344 = vadd.f32 %v296, %v315
          %v345 = vadd.f32 %v297, %v317
          %v346 = vadd.f32 %v298, %v319
          %v347 = vadd.f32 %v299, %v321
          %v348 = vadd.f32 %v300, %v323
          %v349 = vadd.f32 %v301, %v325
          %v350 = vadd.f32 %v302, %v327
          %v351 = vadd.f32 %v303, %v329
          %v352 = vadd.f32 %v304, %v331
          %v353 = vadd.f32 %v305, %v333
          %v354 = vadd.f32 %v306, %v335
          %v355 = vadd.f32 %v307, %v337
          %v356 = vadd.f32 %v308, %v339
          %v357 = vadd.f32 %v309, %v341
          %358 = vrot.lane.b32.xlu0 %v342, 126
          %v359 = vpop.permute.xlu0 %358
          %360 = vrot.lane.b32.xlu0 %v343, 126
          %v361 = vpop.permute.xlu0 %360
          %362 = vrot.lane.b32.xlu0 %v344, 126
          %v363 = vpop.permute.xlu0 %362
          %364 = vrot.lane.b32.xlu0 %v345, 126
          %v365 = vpop.permute.xlu0 %364
          %366 = vrot.lane.b32.xlu0 %v346, 126
          %v367 = vpop.permute.xlu0 %366
          %368 = vrot.lane.b32.xlu0 %v347, 126
          %v369 = vpop.permute.xlu0 %368
          %370 = vrot.lane.b32.xlu0 %v348, 126
          %v371 = vpop.permute.xlu0 %370
          %372 = vrot.lane.b32.xlu0 %v349, 126
          %v373 = vpop.permute.xlu0 %372
          %374 = vrot.lane.b32.xlu0 %v350, 126
          %v375 = vpop.permute.xlu0 %374
          %376 = vrot.lane.b32.xlu0 %v351, 126
          %v377 = vpop.permute.xlu0 %376
          %378 = vrot.lane.b32.xlu0 %v352, 126
          %v379 = vpop.permute.xlu0 %378
          %380 = vrot.lane.b32.xlu0 %v353, 126
          %v381 = vpop.permute.xlu0 %380
          %382 = vrot.lane.b32.xlu0 %v354, 126
          %v383 = vpop.permute.xlu0 %382
          %384 = vrot.lane.b32.xlu0 %v355, 126
          %v385 = vpop.permute.xlu0 %384
          %386 = vrot.lane.b32.xlu0 %v356, 126
          %v387 = vpop.permute.xlu0 %386
          %388 = vrot.lane.b32.xlu0 %v357, 126
          %v389 = vpop.permute.xlu0 %388
          %v390 = vadd.f32 %v342, %v359
          %v391 = vadd.f32 %v343, %v361
          %v392 = vadd.f32 %v344, %v363
          %v393 = vadd.f32 %v345, %v365
          %v394 = vadd.f32 %v346, %v367
          %v395 = vadd.f32 %v347, %v369
          %v396 = vadd.f32 %v348, %v371
          %v397 = vadd.f32 %v349, %v373
          %v398 = vadd.f32 %v350, %v375
          %v399 = vadd.f32 %v351, %v377
          %v400 = vadd.f32 %v352, %v379
          %v401 = vadd.f32 %v353, %v381
          %v402 = vadd.f32 %v354, %v383
          %v403 = vadd.f32 %v355, %v385
          %v404 = vadd.f32 %v356, %v387
          %v405 = vadd.f32 %v357, %v389
          %s406 = sadd.s32 %s204, %s243
          %v407 = vstv %s406
          %v408 = vadd.s32 %v220, %v407
          %v409 = vadd.s32 %v221, %v407
          %v410 = vadd.s32 %v222, %v407
          %v411 = vadd.s32 %v223, %v407
          %v412 = vadd.s32 %v224, %v407
          %v413 = vadd.s32 %v225, %v407
          %v414 = vadd.s32 %v226, %v407
          %v415 = vadd.s32 %v227, %v407
          %v416 = vadd.s32 %v228, %v407
          %v417 = vadd.s32 %v229, %v407
          %v418 = vadd.s32 %v230, %v407
          %v419 = vadd.s32 %v231, %v407
          %v420 = vadd.s32 %v232, %v407
          %v421 = vadd.s32 %v233, %v407
          %v422 = vadd.s32 %v234, %v407
          %v423 = vadd.s32 %v235, %v407
          %vm424 = vcmp.lt.s32.totalorder %v408, 2048
          %vm425 = vcmp.lt.s32.totalorder %v409, 2048
          %vm426 = vcmp.lt.s32.totalorder %v410, 2048
          %vm427 = vcmp.lt.s32.totalorder %v411, 2048
          %vm428 = vcmp.lt.s32.totalorder %v412, 2048
          %vm429 = vcmp.lt.s32.totalorder %v413, 2048
          %vm430 = vcmp.lt.s32.totalorder %v414, 2048
          %vm431 = vcmp.lt.s32.totalorder %v415, 2048
          %vm432 = vcmp.lt.s32.totalorder %v416, 2048
          %vm433 = vcmp.lt.s32.totalorder %v417, 2048
          %vm434 = vcmp.lt.s32.totalorder %v418, 2048
          %vm435 = vcmp.lt.s32.totalorder %v419, 2048
          %vm436 = vcmp.lt.s32.totalorder %v420, 2048
          %vm437 = vcmp.lt.s32.totalorder %v421, 2048
          %vm438 = vcmp.lt.s32.totalorder %v422, 2048
          %vm439 = vcmp.lt.s32.totalorder %v423, 2048
          %v440 = vsel %vm218, 1, 0
          %v441 = vlaneseq
          %v442 = vshrl.u32 %v441, 7
          %v443 = vsub.s32 0, %v442
          %v444 = vrot.slane %v440, %v443
          %vm445 = vcmp.eq.s32.totalorder %v444, 1
          %v446 = vsel %vm424, 1, 0
          %v447 = vsel %vm425, 1, 0
          %v448 = vsel %vm426, 1, 0
          %v449 = vsel %vm427, 1, 0
          %v450 = vsel %vm428, 1, 0
          %v451 = vsel %vm429, 1, 0
          %v452 = vsel %vm430, 1, 0
          %v453 = vsel %vm431, 1, 0
          %v454 = vsel %vm432, 1, 0
          %v455 = vsel %vm433, 1, 0
          %v456 = vsel %vm434, 1, 0
          %v457 = vsel %vm435, 1, 0
          %v458 = vsel %vm436, 1, 0
          %v459 = vsel %vm437, 1, 0
          %v460 = vsel %vm438, 1, 0
          %v461 = vsel %vm439, 1, 0
          %vm462 = vcmp.eq.s32.totalorder %v446, 1
          %vm463 = vcmp.eq.s32.totalorder %v447, 1
          %vm464 = vcmp.eq.s32.totalorder %v448, 1
          %vm465 = vcmp.eq.s32.totalorder %v449, 1
          %vm466 = vcmp.eq.s32.totalorder %v450, 1
          %vm467 = vcmp.eq.s32.totalorder %v451, 1
          %vm468 = vcmp.eq.s32.totalorder %v452, 1
          %vm469 = vcmp.eq.s32.totalorder %v453, 1
          %vm470 = vcmp.eq.s32.totalorder %v454, 1
          %vm471 = vcmp.eq.s32.totalorder %v455, 1
          %vm472 = vcmp.eq.s32.totalorder %v456, 1
          %vm473 = vcmp.eq.s32.totalorder %v457, 1
          %vm474 = vcmp.eq.s32.totalorder %v458, 1
          %vm475 = vcmp.eq.s32.totalorder %v459, 1
          %vm476 = vcmp.eq.s32.totalorder %v460, 1
          %vm477 = vcmp.eq.s32.totalorder %v461, 1
          %vm478 = vmand %vm445, %vm462
          %vm479 = vmand %vm445, %vm463
          %vm480 = vmand %vm445, %vm464
          %vm481 = vmand %vm445, %vm465
          %vm482 = vmand %vm445, %vm466
          %vm483 = vmand %vm445, %vm467
          %vm484 = vmand %vm445, %vm468
          %vm485 = vmand %vm445, %vm469
          %vm486 = vmand %vm445, %vm470
          %vm487 = vmand %vm445, %vm471
          %vm488 = vmand %vm445, %vm472
          %vm489 = vmand %vm445, %vm473
          %vm490 = vmand %vm445, %vm474
          %vm491 = vmand %vm445, %vm475
          %vm492 = vmand %vm445, %vm476
          %vm493 = vmand %vm445, %vm477
          %v494 = vrsqrt.pop %v390
          %v495 = vmul.f32 %v390, %v494
          %vm496 = vcmp.eq.f32.partialorder %v390, inf
          %v497 = vsel %vm496, %v390, %v495
          %vm498 = vcmp.eq.f32.partialorder %v390, 0.0
          %v499 = vand.u32 %v390, 2147483648
          %v500 = vsel %vm498, %v499, %v497
          %v501 = vrsqrt.pop %v391
          %v502 = vmul.f32 %v391, %v501
          %vm503 = vcmp.eq.f32.partialorder %v391, inf
          %v504 = vsel %vm503, %v391, %v502
          %vm505 = vcmp.eq.f32.partialorder %v391, 0.0
          %v506 = vand.u32 %v391, 2147483648
          %v507 = vsel %vm505, %v506, %v504
          %v508 = vrsqrt.pop %v392
          %v509 = vmul.f32 %v392, %v508
          %vm510 = vcmp.eq.f32.partialorder %v392, inf
          %v511 = vsel %vm510, %v392, %v509
          %vm512 = vcmp.eq.f32.partialorder %v392, 0.0
          %v513 = vand.u32 %v392, 2147483648
          %v514 = vsel %vm512, %v513, %v511
          %v515 = vrsqrt.pop %v393
          %v516 = vmul.f32 %v393, %v515
          %vm517 = vcmp.eq.f32.partialorder %v393, inf
          %v518 = vsel %vm517, %v393, %v516
          %vm519 = vcmp.eq.f32.partialorder %v393, 0.0
          %v520 = vand.u32 %v393, 2147483648
          %v521 = vsel %vm519, %v520, %v518
          %v522 = vrsqrt.pop %v394
          %v523 = vmul.f32 %v394, %v522
          %vm524 = vcmp.eq.f32.partialorder %v394, inf
          %v525 = vsel %vm524, %v394, %v523
          %vm526 = vcmp.eq.f32.partialorder %v394, 0.0
          %v527 = vand.u32 %v394, 2147483648
          %v528 = vsel %vm526, %v527, %v525
          %v529 = vrsqrt.pop %v395
          %v530 = vmul.f32 %v395, %v529
          %vm531 = vcmp.eq.f32.partialorder %v395, inf
          %v532 = vsel %vm531, %v395, %v530
          %vm533 = vcmp.eq.f32.partialorder %v395, 0.0
          %v534 = vand.u32 %v395, 2147483648
          %v535 = vsel %vm533, %v534, %v532
          %v536 = vrsqrt.pop %v396
          %v537 = vmul.f32 %v396, %v536
          %vm538 = vcmp.eq.f32.partialorder %v396, inf
          %v539 = vsel %vm538, %v396, %v537
          %vm540 = vcmp.eq.f32.partialorder %v396, 0.0
          %v541 = vand.u32 %v396, 2147483648
          %v542 = vsel %vm540, %v541, %v539
          %v543 = vrsqrt.pop %v397
          %v544 = vmul.f32 %v397, %v543
          %vm545 = vcmp.eq.f32.partialorder %v397, inf
          %v546 = vsel %vm545, %v397, %v544
          %vm547 = vcmp.eq.f32.partialorder %v397, 0.0
          %v548 = vand.u32 %v397, 2147483648
          %v549 = vsel %vm547, %v548, %v546
          %v550 = vrsqrt.pop %v398
          %v551 = vmul.f32 %v398, %v550
          %vm552 = vcmp.eq.f32.partialorder %v398, inf
          %v553 = vsel %vm552, %v398, %v551
          %vm554 = vcmp.eq.f32.partialorder %v398, 0.0
          %v555 = vand.u32 %v398, 2147483648
          %v556 = vsel %vm554, %v555, %v553
          %v557 = vrsqrt.pop %v399
          %v558 = vmul.f32 %v399, %v557
          %vm559 = vcmp.eq.f32.partialorder %v399, inf
          %v560 = vsel %vm559, %v399, %v558
          %vm561 = vcmp.eq.f32.partialorder %v399, 0.0
          %v562 = vand.u32 %v399, 2147483648
          %v563 = vsel %vm561, %v562, %v560
          %v564 = vrsqrt.pop %v400
          %v565 = vmul.f32 %v400, %v564
          %vm566 = vcmp.eq.f32.partialorder %v400, inf
          %v567 = vsel %vm566, %v400, %v565
          %vm568 = vcmp.eq.f32.partialorder %v400, 0.0
          %v569 = vand.u32 %v400, 2147483648
          %v570 = vsel %vm568, %v569, %v567
          %v571 = vrsqrt.pop %v401
          %v572 = vmul.f32 %v401, %v571
          %vm573 = vcmp.eq.f32.partialorder %v401, inf
          %v574 = vsel %vm573, %v401, %v572
          %vm575 = vcmp.eq.f32.partialorder %v401, 0.0
          %v576 = vand.u32 %v401, 2147483648
          %v577 = vsel %vm575, %v576, %v574
          %v578 = vrsqrt.pop %v402
          %v579 = vmul.f32 %v402, %v578
          %vm580 = vcmp.eq.f32.partialorder %v402, inf
          %v581 = vsel %vm580, %v402, %v579
          %vm582 = vcmp.eq.f32.partialorder %v402, 0.0
          %v583 = vand.u32 %v402, 2147483648
          %v584 = vsel %vm582, %v583, %v581
          %v585 = vrsqrt.pop %v403
          %v586 = vmul.f32 %v403, %v585
          %vm587 = vcmp.eq.f32.partialorder %v403, inf
          %v588 = vsel %vm587, %v403, %v586
          %vm589 = vcmp.eq.f32.partialorder %v403, 0.0
          %v590 = vand.u32 %v403, 2147483648
          %v591 = vsel %vm589, %v590, %v588
          %v592 = vrsqrt.pop %v404
          %v593 = vmul.f32 %v404, %v592
          %vm594 = vcmp.eq.f32.partialorder %v404, inf
          %v595 = vsel %vm594, %v404, %v593
          %vm596 = vcmp.eq.f32.partialorder %v404, 0.0
          %v597 = vand.u32 %v404, 2147483648
          %v598 = vsel %vm596, %v597, %v595
          %v599 = vrsqrt.pop %v405
          %v600 = vmul.f32 %v405, %v599
          %vm601 = vcmp.eq.f32.partialorder %v405, inf
          %v602 = vsel %vm601, %v405, %v600
          %vm603 = vcmp.eq.f32.partialorder %v405, 0.0
          %v604 = vand.u32 %v405, 2147483648
          %v605 = vsel %vm603, %v604, %v602
          %v606 = vsel %vm478, %v500, 0.0
          %v607 = vsel %vm479, %v507, 0.0
          %v608 = vsel %vm480, %v514, 0.0
          %v609 = vsel %vm481, %v521, 0.0
          %v610 = vsel %vm482, %v528, 0.0
          %v611 = vsel %vm483, %v535, 0.0
          %v612 = vsel %vm484, %v542, 0.0
          %v613 = vsel %vm485, %v549, 0.0
          %v614 = vsel %vm486, %v556, 0.0
          %v615 = vsel %vm487, %v563, 0.0
          %v616 = vsel %vm488, %v570, 0.0
          %v617 = vsel %vm489, %v577, 0.0
          %v618 = vsel %vm490, %v584, 0.0
          %v619 = vsel %vm491, %v591, 0.0
          %v620 = vsel %vm492, %v598, 0.0
          %v621 = vsel %vm493, %v605, 0.0
          %v622 = vadd.f32 %v606, %v607
          %v623 = vadd.f32 %v622, %v608
          %v624 = vadd.f32 %v623, %v609
          %v625 = vadd.f32 %v624, %v610
          %v626 = vadd.f32 %v625, %v611
          %v627 = vadd.f32 %v626, %v612
          %v628 = vadd.f32 %v627, %v613
          %v629 = vadd.f32 %v628, %v614
          %v630 = vadd.f32 %v629, %v615
          %v631 = vadd.f32 %v630, %v616
          %v632 = vadd.f32 %v631, %v617
          %v633 = vadd.f32 %v632, %v618
          %v634 = vadd.f32 %v633, %v619
          %v635 = vadd.f32 %v634, %v620
          %v636 = vadd.f32 %v635, %v621
          %v637 = vadd.f32 %v242, %v636
        $region41: #{reg_loss.1} parent=27 // loop_footer
          %s241 = sadd.s32 1, %s237
        $region42: #{reg_loss.1} parent=27 // loop_footer_branch
          %236 = sbr.rel target = $region38
        $region43: #{reg_loss.1} parent=27 // loop_exit
          _
        %638 = vst [vmem:[%s203] sm:$0xff] %v242
        %p639 = scmp.lt.s32.totalorder %s19, 1
        %s640 = scalar_select %p639, %s19, 1
        %s641 = smul.addr %s640, 8
        %s642 = scalar_lea.vmem %s2, %s641
        // Predicated region
        $region44: #{reg_loss.1} parent=27 // pred_check
          %p643 = pneg %p89
        $region45: #{reg_loss.1} parent=27 // pred_check_branch
          %645 = sbr.rel (%p643) target = $region47
        $region46: #{reg_loss.1} parent=27 // pred_region
          _
        $region47: #{reg_loss.1} parent=27 // pred_fallthru
          _
      $region28: #{reg_loss.1} parent=5 // pred_fallthru
        _
      %p646 = scmp.le.s32.totalorder 2, %s14
      // Predicated region
      $region48: #{reg_loss.1} parent=5 // pred_check
        %p647 = pneg %p646
      $region49: #{reg_loss.1} parent=5 // pred_check_branch
        %649 = sbr.rel (%p647) target = $region51
      $region50: #{reg_loss.1} parent=5 // pred_region
        %s650 = ssub.s32 %s14, 2
        // Predicated region
        $region52: #{reg_loss.1} parent=50 // pred_check
          %p651 = pneg %p95
        $region53: #{reg_loss.1} parent=50 // pred_check_branch
          %653 = sbr.rel (%p651) target = $region55
        $region54: #{reg_loss.1} parent=50 // pred_region
          %p654 = scmp.lt.s32.totalorder %s20, 1
          %s655 = scalar_select %p654, %s20, 1
          %s656 = smul.addr %s655, 8
          %s657 = scalar_lea.vmem %s2, %s656
        $region55: #{reg_loss.1} parent=50 // pred_fallthru
          _
      $region51: #{reg_loss.1} parent=5 // pred_fallthru
        _
    $region6: #{reg_loss.1} parent=1 // loop_footer
      %s18 = sadd.s32 1, %s14
    $region7: #{reg_loss.1} parent=1 // loop_footer_branch
      %13 = sbr.rel target = $region3
    $region8: #{reg_loss.1} parent=1 // loop_exit
      _
    %658 = vsyncpa [#allocation3], 1
    %s659 = scalar_lea.sflag [#allocation3], 1
    %660 = vsyncpa %s659, 1
    %661 = vsyncpa [#allocation5], 1
    %s662 = scalar_lea.sflag [#allocation5], 1
    %663 = vsyncpa %s662, 1

</llo_original>
